<compile_context>
chip_gen: v7x
topology: tpu7x:2x2x1
jax: 0.10.0
libtpu: 0.0.40
codegen_flags: <defaults>
</compile_context>

<pallas_src>
import functools

import jax
import jax.numpy as jnp
from jax.experimental import pallas as pl
from jax.experimental.pallas import tpu as pltpu

_LANE = 128       # lane width: hidden padded to a multiple of this (dense vst)
_ROW_PACK = 16    # bf16 sublane pack: minimum row/F_in padding granularity
_MAX_TILE = 2048  # row-tile cap (amortizes ~0.35us/grid-step; tiny VMEM even on v7x)


def _round_up(n, m):
    return (n + m - 1) // m * m


def _mlp_prelu_kernel(x_ref, w1_ref, b1_ref, w2_ref, b2_ref, alpha_ref, o_ref):
    """One (encoder, row-tile) step of Linear -> PReLU -> Linear.

    x_ref:  [T, Fp]  bf16      w1_ref: [Fp, Hp] bf16     b1_ref:    [1, Hp] f32
    w2_ref: [Hp, Hp] bf16      b2_ref: [1, Hp]  f32      alpha_ref: [1, Hp] f32
    o_ref:  [T, Hp]  f32
    """
    h = jnp.dot(x_ref[...], w1_ref[...],
                preferred_element_type=jnp.float32) + b1_ref[...]
    # PReLU (alpha broadcast across lanes; supports scalar or per-channel slope).
    h = jnp.where(h >= 0, h, alpha_ref[...] * h)
    out = jnp.dot(h.astype(w2_ref.dtype), w2_ref[...],
                  preferred_element_type=jnp.float32) + b2_ref[...]
    o_ref[...] = out.astype(o_ref.dtype)


def prepare_encoder2_params(node_raw, edge_raw):
    """Pack both encoders' params into stacked, padded, bf16 kernel operands.

    node_raw / edge_raw: (w1 [F,H], b1 [H], w2 [H,H], b2 [H], alpha scalar).
    Returns a dict of stacked arrays plus the true (unpadded) sizes.
    """
    w1n, b1n, w2n, b2n, an = node_raw
    w1e, b1e, w2e, b2e, ae = edge_raw
    f_node, hidden = w1n.shape
    f_edge = w1e.shape[0]
    assert w1e.shape[1] == hidden
    f_pad = _round_up(max(f_node, f_edge), _ROW_PACK)
    hp = _round_up(hidden, _LANE)

    def pack(w1, b1, w2, b2, a, f_in):
        w1p = jnp.zeros((f_pad, hp), jnp.bfloat16).at[:f_in, :hidden].set(
            w1.astype(jnp.bfloat16))
        b1p = jnp.zeros((1, hp), jnp.float32).at[:, :hidden].set(
            b1.reshape(1, hidden).astype(jnp.float32))
        w2p = jnp.zeros((hp, hp), jnp.bfloat16).at[:hidden, :hidden].set(
            w2.astype(jnp.bfloat16))
        b2p = jnp.zeros((1, hp), jnp.float32).at[:, :hidden].set(
            b2.reshape(1, hidden).astype(jnp.float32))
        a = jnp.asarray(a, jnp.float32).reshape(-1)       # scalar or [H]
        ap = jnp.zeros((1, hp), jnp.float32).at[:, :hidden].set(
            jnp.broadcast_to(a, (hidden,)))
        return w1p, b1p, w2p, b2p, ap

    packs = [pack(w1n, b1n, w2n, b2n, an, f_node),
             pack(w1e, b1e, w2e, b2e, ae, f_edge)]
    return dict(
        w1=jnp.stack([p[0] for p in packs]),      # [2, Fp, Hp] bf16
        b1=jnp.stack([p[1] for p in packs]),      # [2, 1, Hp]  f32
        w2=jnp.stack([p[2] for p in packs]),      # [2, Hp, Hp] bf16
        b2=jnp.stack([p[3] for p in packs]),      # [2, 1, Hp]  f32
        alpha=jnp.stack([p[4] for p in packs]),   # [2, 1, Hp]  f32
        hidden=hidden, f_node=f_node, f_edge=f_edge,
    )


@functools.partial(jax.jit, static_argnames=("hidden",))
def _encoder2_impl(x, z, edge_attr, w1, b1, w2, b2, alpha, *, hidden):
    n, f_node = x.shape
    m, f_edge = edge_attr.shape
    _, f_pad, hp = w1.shape

    # Row padding: bf16 sublane pack (16), NOT 128 — small graphs stay small.
    r0 = _round_up(max(2 * n, m, 1), _ROW_PACK)
    tile_rows = min(r0, _MAX_TILE)
    r_pad = _round_up(r0, tile_rows)

    # Single padded bf16 input slab shared by both encoders:
    #   slab 0 = concat(x, z)   (node encoder),   slab 1 = edge_attr.
    # Padded input columns multiply zero weight rows, so results are unchanged;
    # padded ROWS are not zero after the MLP and are sliced off below.
    inp = jnp.zeros((2, r_pad, f_pad), jnp.bfloat16)
    inp = inp.at[0, :n, :f_node].set(x.astype(jnp.bfloat16))
    inp = inp.at[0, n:2 * n, :f_node].set(z.astype(jnp.bfloat16))
    inp = inp.at[1, :m, :f_edge].set(edge_attr.astype(jnp.bfloat16))

    grid = (2, r_pad // tile_rows)   # (encoder, row-tile); always >= 2 steps
    out = pl.pallas_call(
        _mlp_prelu_kernel,
        out_shape=jax.ShapeDtypeStruct((2, r_pad, hp), jnp.float32),
        grid_spec=pltpu.PrefetchScalarGridSpec(
            num_scalar_prefetch=0,
            grid=grid,
            in_specs=[
                pl.BlockSpec((None, tile_rows, f_pad), lambda e, i: (e, i, 0)),
                # Per-encoder weights/biases: invariant over the row axis, so
                # they are only re-fetched when the encoder axis steps (twice).
                pl.BlockSpec((None, f_pad, hp), lambda e, i: (e, 0, 0)),
                pl.BlockSpec((None, 1, hp), lambda e, i: (e, 0, 0)),
                pl.BlockSpec((None, hp, hp), lambda e, i: (e, 0, 0)),
                pl.BlockSpec((None, 1, hp), lambda e, i: (e, 0, 0)),
                pl.BlockSpec((None, 1, hp), lambda e, i: (e, 0, 0)),
            ],
            out_specs=pl.BlockSpec((None, tile_rows, hp), lambda e, i: (e, i, 0)),
        ),
        compiler_params=pltpu.CompilerParams(
            dimension_semantics=("parallel", "parallel")),
    )(inp, w1, b1, w2, b2, alpha)

    x_out = out[0, :n, :hidden]
    z_out = out[0, n:2 * n, :hidden]
    e_out = out[1, :m, :hidden]
    return x_out, z_out, e_out


def encoder2_forward(x, z, edge_attr, batch, params):
    """Encoder2.forward.  `batch` is accepted but unused (as in the module)."""
    del batch
    return _encoder2_impl(
        x, z, edge_attr,
        params["w1"], params["b1"], params["w2"], params["b2"], params["alpha"],
        hidden=params["hidden"])


# ----------------------------- test harness --------------------------------

def _init_raw_mlp(key, f_in, hidden):
    """Synthetic torch-Linear-style init (shapes/ranges only)."""
    k1, k2, k3, k4 = jax.random.split(key, 4)
    s1 = 1.0 / jnp.sqrt(f_in)
    s2 = 1.0 / jnp.sqrt(hidden)
    w1 = jax.random.uniform(k1, (f_in, hidden), jnp.float32, -s1, s1)
    b1 = jax.random.uniform(k2, (hidden,), jnp.float32, -s1, s1)
    w2 = jax.random.uniform(k3, (hidden, hidden), jnp.float32, -s2, s2)
    b2 = jax.random.uniform(k4, (hidden,), jnp.float32, -s2, s2)
    alpha = jnp.float32(0.25)            # nn.PReLU() default init
    return (w1, b1, w2, b2, alpha)


def _reference_f32(rows, raw):
    """True f32 reference matching the PyTorch module exactly."""
    w1, b1, w2, b2, alpha = raw
    h = rows @ w1 + b1
    h = jnp.where(h >= 0, h, alpha * h)
    return h @ w2 + b2


def _reference_bf16(rows, params, enc, f_in):
    """Reference mirroring the kernel's bf16 operand rounding (tight check)."""
    w1 = params["w1"][enc].astype(jnp.float32)
    w2 = params["w2"][enc].astype(jnp.float32)
    b1, b2, alpha = params["b1"][enc], params["b2"][enc], params["alpha"][enc]
    hidden = params["hidden"]
    f_pad = w1.shape[0]
    xp = jnp.zeros((rows.shape[0], f_pad), jnp.float32).at[:, :f_in].set(
        rows.astype(jnp.bfloat16).astype(jnp.float32))
    h = xp @ w1 + b1
    h = jnp.where(h >= 0, h, alpha * h)
    out = h.astype(jnp.bfloat16).astype(jnp.float32) @ w2 + b2
    return out[:, :hidden]


if __name__ == "__main__":
    key = jax.random.PRNGKey(0)
    k_node, k_edge, kx, kz, ke = jax.random.split(key, 5)

    # Small shapes consistent with the module.
    n_atom_feats, n_bond_feats, n_hidden = 16, 8, 32
    num_nodes, num_edges = 16, 24
    batch_graphs = 2

    node_raw = _init_raw_mlp(k_node, n_atom_feats, n_hidden)
    edge_raw = _init_raw_mlp(k_edge, n_bond_feats, n_hidden)
    params = prepare_encoder2_params(node_raw, edge_raw)

    x = jax.random.normal(kx, (num_nodes, n_atom_feats), jnp.float32)
    z = jax.random.normal(kz, (num_nodes, n_atom_feats), jnp.float32)
    edge_attr = jax.random.normal(ke, (num_edges, n_bond_feats), jnp.float32)
    batch = jnp.repeat(jnp.arange(batch_graphs, dtype=jnp.int32),
                       num_nodes // batch_graphs)

    outs = encoder2_forward(x, z, edge_attr, batch, params)
    outs = jax.block_until_ready(outs)
    x_out, z_out, e_out = outs

    # Shape checks.
    assert x_out.shape == (num_nodes, n_hidden)
    assert z_out.shape == (num_nodes, n_hidden)
    assert e_out.shape == (num_edges, n_hidden)

    # Tight check: kernel vs a reference that mirrors its bf16 operand rounding.
    for got, ref in [
        (x_out, _reference_bf16(x, params, 0, n_atom_feats)),
        (z_out, _reference_bf16(z, params, 0, n_atom_feats)),
        (e_out, _reference_bf16(edge_attr, params, 1, n_bond_feats)),
    ]:
        assert jnp.allclose(got, ref, atol=2e-3, rtol=2e-3), "bf16-ref mismatch"

    # Realistic check: kernel vs the true f32 module semantics (bf16 tolerance).
    for got, ref in [
        (x_out, _reference_f32(x, node_raw)),
        (z_out, _reference_f32(z, node_raw)),
        (e_out, _reference_f32(edge_attr, edge_raw)),
    ]:
        assert jnp.allclose(got, ref, atol=5e-2, rtol=5e-2), "f32-ref mismatch"

    print("KERNEL_OK")
</pallas_src>

<mosaic_0001>
module attributes {stable_mosaic.version = 11 : i64} {
  func.func @_mlp_prelu_kernel(%arg0: i32, %arg1: i32, %arg2: memref<1x32x16xbf16, #tpu.memory_space<vmem>>, %arg3: memref<1x16x128xbf16, #tpu.memory_space<vmem>>, %arg4: memref<1x1x128xf32, #tpu.memory_space<vmem>>, %arg5: memref<1x128x128xbf16, #tpu.memory_space<vmem>>, %arg6: memref<1x1x128xf32, #tpu.memory_space<vmem>>, %arg7: memref<1x1x128xf32, #tpu.memory_space<vmem>>, %arg8: memref<1x32x128xf32, #tpu.memory_space<vmem>>) attributes {dimension_semantics = [#tpu.dimension_semantics<parallel>, #tpu.dimension_semantics<parallel>], iteration_bounds = array<i64: 2, 1>, scalar_prefetch = 0 : i64, scratch_operands = 0 : i64, tpu.core_type = #tpu.core_type<tc>, window_params = [{transform_indices = @transform_0, window_bounds = array<i64: 1, 32, 16>}, {transform_indices = @transform_1, window_bounds = array<i64: 1, 16, 128>}, {transform_indices = @transform_2, window_bounds = array<i64: 1, 1, 128>}, {transform_indices = @transform_3, window_bounds = array<i64: 1, 128, 128>}, {transform_indices = @transform_4, window_bounds = array<i64: 1, 1, 128>}, {transform_indices = @transform_5, window_bounds = array<i64: 1, 1, 128>}, {transform_indices = @transform_6, window_bounds = array<i64: 1, 32, 128>}]} {
    %c0 = arith.constant 0 : index
    %c0_0 = arith.constant 0 : index
    %c0_1 = arith.constant 0 : index
    %0 = vector.load %arg2[%c0, %c0_0, %c0_1] : memref<1x32x16xbf16, #tpu.memory_space<vmem>>, vector<1x32x16xbf16>
    %1 = vector.shape_cast %0 : vector<1x32x16xbf16> to vector<32x16xbf16>
    %c0_2 = arith.constant 0 : index
    %c0_3 = arith.constant 0 : index
    %c0_4 = arith.constant 0 : index
    %2 = vector.load %arg3[%c0_2, %c0_3, %c0_4] : memref<1x16x128xbf16, #tpu.memory_space<vmem>>, vector<1x16x128xbf16>
    %3 = vector.shape_cast %2 : vector<1x16x128xbf16> to vector<16x128xbf16>
    %cst = arith.constant dense<0.000000e+00> : vector<32x128xf32>
    %4 = tpu.matmul %1, %3, %cst {dimension_numbers = #tpu.dot_dimension_numbers<[1], [0], [0], [1], [0, 0, 1, 1], [], []>} : vector<32x16xbf16>, vector<16x128xbf16>, vector<32x128xf32> -> vector<32x128xf32>
    %c0_5 = arith.constant 0 : index
    %c0_6 = arith.constant 0 : index
    %c0_7 = arith.constant 0 : index
    %5 = vector.load %arg4[%c0_5, %c0_6, %c0_7] : memref<1x1x128xf32, #tpu.memory_space<vmem>>, vector<1x1x128xf32>
    %6 = vector.shape_cast %5 : vector<1x1x128xf32> to vector<1x128xf32>
    %7 = vector.broadcast %6 : vector<1x128xf32> to vector<32x128xf32>
    %8 = arith.addf %4, %7 : vector<32x128xf32>
    %cst_8 = arith.constant 0.000000e+00 : f32
    %9 = vector.broadcast %cst_8 : f32 to vector<32x128xf32>
    %10 = arith.cmpf oge, %8, %9 : vector<32x128xf32>
    %c0_9 = arith.constant 0 : index
    %c0_10 = arith.constant 0 : index
    %c0_11 = arith.constant 0 : index
    %11 = vector.load %arg7[%c0_9, %c0_10, %c0_11] : memref<1x1x128xf32, #tpu.memory_space<vmem>>, vector<1x1x128xf32>
    %12 = vector.shape_cast %11 : vector<1x1x128xf32> to vector<1x128xf32>
    %13 = vector.broadcast %12 : vector<1x128xf32> to vector<32x128xf32>
    %14 = arith.mulf %13, %8 : vector<32x128xf32>
    %15 = arith.select %10, %8, %14 : vector<32x128xi1>, vector<32x128xf32>
    %16 = arith.truncf %15 : vector<32x128xf32> to vector<32x128xbf16>
    %c0_12 = arith.constant 0 : index
    %c0_13 = arith.constant 0 : index
    %c0_14 = arith.constant 0 : index
    %17 = vector.load %arg5[%c0_12, %c0_13, %c0_14] : memref<1x128x128xbf16, #tpu.memory_space<vmem>>, vector<1x128x128xbf16>
    %18 = vector.shape_cast %17 : vector<1x128x128xbf16> to vector<128x128xbf16>
    %cst_15 = arith.constant dense<0.000000e+00> : vector<32x128xf32>
    %19 = tpu.matmul %16, %18, %cst_15 {dimension_numbers = #tpu.dot_dimension_numbers<[1], [0], [0], [1], [0, 0, 1, 1], [], []>} : vector<32x128xbf16>, vector<128x128xbf16>, vector<32x128xf32> -> vector<32x128xf32>
    %c0_16 = arith.constant 0 : index
    %c0_17 = arith.constant 0 : index
    %c0_18 = arith.constant 0 : index
    %20 = vector.load %arg6[%c0_16, %c0_17, %c0_18] : memref<1x1x128xf32, #tpu.memory_space<vmem>>, vector<1x1x128xf32>
    %21 = vector.shape_cast %20 : vector<1x1x128xf32> to vector<1x128xf32>
    %22 = vector.broadcast %21 : vector<1x128xf32> to vector<32x128xf32>
    %23 = arith.addf %19, %22 : vector<32x128xf32>
    %c0_19 = arith.constant 0 : index
    %c0_20 = arith.constant 0 : index
    %c0_21 = arith.constant 0 : index
    %24 = vector.load %arg8[%c0_19, %c0_20, %c0_21] : memref<1x32x128xf32, #tpu.memory_space<vmem>>, vector<1x32x128xf32>
    %25 = vector.shape_cast %24 : vector<1x32x128xf32> to vector<32x128xf32>
    %26 = vector.shape_cast %23 : vector<32x128xf32> to vector<1x32x128xf32>
    tpu.vector_store %arg8[%c0_19, %c0_20, %c0_21], %26 {strides = array<i32>} : memref<1x32x128xf32, #tpu.memory_space<vmem>>, vector<1x32x128xf32>,
    return
  }
  func.func @transform_0(%arg0: i32, %arg1: i32) -> (i32, i32, i32) {
    %c0_i32 = arith.constant 0 : i32
    %c0_i32_0 = arith.constant 0 : i32
    return %arg0, %arg1, %c0_i32 : i32, i32, i32
  }
  func.func @transform_1(%arg0: i32, %arg1: i32) -> (i32, i32, i32) {
    %c0_i32 = arith.constant 0 : i32
    %c0_i32_0 = arith.constant 0 : i32
    %c0_i32_1 = arith.constant 0 : i32
    return %arg0, %c0_i32, %c0_i32_0 : i32, i32, i32
  }
  func.func @transform_2(%arg0: i32, %arg1: i32) -> (i32, i32, i32) {
    %c0_i32 = arith.constant 0 : i32
    %c0_i32_0 = arith.constant 0 : i32
    %c0_i32_1 = arith.constant 0 : i32
    return %arg0, %c0_i32, %c0_i32_0 : i32, i32, i32
  }
  func.func @transform_3(%arg0: i32, %arg1: i32) -> (i32, i32, i32) {
    %c0_i32 = arith.constant 0 : i32
    %c0_i32_0 = arith.constant 0 : i32
    %c0_i32_1 = arith.constant 0 : i32
    return %arg0, %c0_i32, %c0_i32_0 : i32, i32, i32
  }
  func.func @transform_4(%arg0: i32, %arg1: i32) -> (i32, i32, i32) {
    %c0_i32 = arith.constant 0 : i32
    %c0_i32_0 = arith.constant 0 : i32
    %c0_i32_1 = arith.constant 0 : i32
    return %arg0, %c0_i32, %c0_i32_0 : i32, i32, i32
  }
  func.func @transform_5(%arg0: i32, %arg1: i32) -> (i32, i32, i32) {
    %c0_i32 = arith.constant 0 : i32
    %c0_i32_0 = arith.constant 0 : i32
    %c0_i32_1 = arith.constant 0 : i32
    return %arg0, %c0_i32, %c0_i32_0 : i32, i32, i32
  }
  func.func @transform_6(%arg0: i32, %arg1: i32) -> (i32, i32, i32) {
    %c0_i32 = arith.constant 0 : i32
    %c0_i32_0 = arith.constant 0 : i32
    return %arg0, %arg1, %c0_i32 : i32, i32, i32
  }
}

</mosaic_0001>

<llo_original>
// kernel: _encoder2_impl.1
$region0: #{_encoder2_impl.1}
  #allocation0 [shape = 'u32[]', space=smem, size = 0x4, offset = 0x4, fixed_abs, tag = 'smem constant byte address 0x4 - core index']
  #allocation1 [shape = 'u32[144,128]{1,0:T(1,128)}', space=vmem, size = 0x12000, scoped, tag = 'internal scratch']
  %s0 = inlined_call_operand.vmem [shape: bf16[2,32,16], index: 0, kind: input, shape index: {}]
  %s1 = inlined_call_operand.vmem [shape: bf16[2,16,128], index: 1, kind: input, shape index: {}]
  %s2 = inlined_call_operand.vmem [shape: f32[2,1,128], index: 2, kind: input, shape index: {}]
  %s3 = inlined_call_operand.vmem [shape: bf16[2,128,128], index: 3, kind: input, shape index: {}]
  %s4 = inlined_call_operand.vmem [shape: f32[2,1,128], index: 4, kind: input, shape index: {}]
  %s5 = inlined_call_operand.vmem [shape: f32[2,1,128], index: 5, kind: input, shape index: {}]
  %s6 = inlined_call_operand.vmem [shape: f32[2,32,128], index: 6, kind: output, shape index: {}]
  %s7 = sld [smem:[#allocation0]]
  $region57: #{_encoder2_impl.1} parent=0
    _
  %s9 = ssub.s32 1, %s7
  %s10 = scalar_select 0, %s9, %s7
  loop: start=0, step=1, limit=4
  $region2: #{_encoder2_impl.1} parent=0 // loop_pre_header
    _
  $region3: #{_encoder2_impl.1} parent=0 // loop_header
    %s12 = sphi 0, %s16
    %p13 = scmp.ge.s32.totalorder %s12, 4
    %s19 = sphi 0, %s31
    %s20 = sphi 0, %s27
    %s21 = sphi 0, %s19
    %s22 = sphi 0, %s20
    %s23 = sphi 0, %s21
    %s24 = sphi 0, %s22
    %s36 = sphi 0, %s38
    %s39 = sphi 0, %s36
    %s40 = sphi 0, %s39
    %s56 = sphi 0, %s40
    %s62 = sphi 0, %s64
    %s65 = sphi 0, %s62
    %s66 = sphi 0, %s65
    %s82 = sphi 0, %s66
    %s88 = sphi 0, %s90
    %s91 = sphi 0, %s88
    %s92 = sphi 0, %s91
    %s108 = sphi 0, %s92
    %s114 = sphi 0, %s116
    %s117 = sphi 0, %s114
    %s118 = sphi 0, %s117
    %s134 = sphi 0, %s118
    %s140 = sphi 0, %s142
    %s143 = sphi 0, %s140
    %s144 = sphi 0, %s143
    %s160 = sphi 0, %s144
    %s166 = sphi 0, %s168
    %s169 = sphi 0, %s166
    %s170 = sphi 0, %s169
    %s186 = sphi 0, %s170
    %s194 = sphi 0, %s196
    %s197 = sphi 0, %s194
    %s198 = sphi 0, %s197
    %s214 = sphi 0, %s198
  $region4: #{_encoder2_impl.1} parent=0 // loop_header_branch
    %15 = sbr.rel (%p13) target = $region8
  $region5: #{_encoder2_impl.1} parent=0 // loop_body
    %s17 = ssub.s32 %s12, 1
    %s18 = ssub.s32 %s12, 2
    %s25 = sadd.s32 1, %s20
    %p26 = scmp.ge.s32.totalorder %s25, 1
    %s27 = scalar_select %p26, 0, %s25
    %s28 = sadd.s32 1, %s19
    %s29 = scalar_select %p26, %s28, %s19
    %p30 = scmp.ge.s32.totalorder %s29, 2
    %s31 = scalar_select %p30, 0, %s29
    %s32 = ssub.s32 %s19, %s31
    %s33 = ssub.s32 %s20, %s27
    %s34 = sor.u32 %s32, %s33
    %p35 = scmp.eq.s32.totalorder %s34, 0
    %s37 = sadd.s32 %s36, 1
    %s38 = scalar_select %p35, %s36, %s37
    %p41 = pneg %p35
    %p42 = scmp.eq.s32.totalorder %s12, 1
    %p43 = por %p41, %p42
    %p44 = scmp.ne.s32.totalorder %s36, %s39
    %p45 = scmp.eq.s32.totalorder %s12, 0
    %p46 = por %p44, %p45
    %p47 = scmp.ne.s32.totalorder %s36, %s39
    %p48 = scmp.eq.s32.totalorder %s17, 1
    %p49 = por %p47, %p48
    %p50 = scmp.ne.s32.totalorder %s39, %s40
    %p51 = scmp.eq.s32.totalorder %s17, 0
    %p52 = por %p50, %p51
    %p53 = scmp.ne.s32.totalorder %s39, %s40
    %p54 = scmp.eq.s32.totalorder %s18, 1
    %p55 = por %p53, %p54
    %p57 = scmp.ne.s32.totalorder %s40, %s56
    %p58 = scmp.eq.s32.totalorder %s18, 0
    %p59 = por %p57, %p58
    %s60 = ssub.s32 %s19, %s31
    %p61 = scmp.eq.s32.totalorder %s60, 0
    %s63 = sadd.s32 %s62, 1
    %s64 = scalar_select %p61, %s62, %s63
    %p67 = pneg %p61
    %p68 = scmp.eq.s32.totalorder %s12, 1
    %p69 = por %p67, %p68
    %p70 = scmp.ne.s32.totalorder %s62, %s65
    %p71 = scmp.eq.s32.totalorder %s12, 0
    %p72 = por %p70, %p71
    %p73 = scmp.ne.s32.totalorder %s62, %s65
    %p74 = scmp.eq.s32.totalorder %s17, 1
    %p75 = por %p73, %p74
    %p76 = scmp.ne.s32.totalorder %s65, %s66
    %p77 = scmp.eq.s32.totalorder %s17, 0
    %p78 = por %p76, %p77
    %p79 = scmp.ne.s32.totalorder %s65, %s66
    %p80 = scmp.eq.s32.totalorder %s18, 1
    %p81 = por %p79, %p80
    %p83 = scmp.ne.s32.totalorder %s66, %s82
    %p84 = scmp.eq.s32.totalorder %s18, 0
    %p85 = por %p83, %p84
    %s86 = ssub.s32 %s19, %s31
    %p87 = scmp.eq.s32.totalorder %s86, 0
    %s89 = sadd.s32 %s88, 1
    %s90 = scalar_select %p87, %s88, %s89
    %p93 = pneg %p87
    %p94 = scmp.eq.s32.totalorder %s12, 1
    %p95 = por %p93, %p94
    %p96 = scmp.ne.s32.totalorder %s88, %s91
    %p97 = scmp.eq.s32.totalorder %s12, 0
    %p98 = por %p96, %p97
    %p99 = scmp.ne.s32.totalorder %s88, %s91
    %p100 = scmp.eq.s32.totalorder %s17, 1
    %p101 = por %p99, %p100
    %p102 = scmp.ne.s32.totalorder %s91, %s92
    %p103 = scmp.eq.s32.totalorder %s17, 0
    %p104 = por %p102, %p103
    %p105 = scmp.ne.s32.totalorder %s91, %s92
    %p106 = scmp.eq.s32.totalorder %s18, 1
    %p107 = por %p105, %p106
    %p109 = scmp.ne.s32.totalorder %s92, %s108
    %p110 = scmp.eq.s32.totalorder %s18, 0
    %p111 = por %p109, %p110
    %s112 = ssub.s32 %s19, %s31
    %p113 = scmp.eq.s32.totalorder %s112, 0
    %s115 = sadd.s32 %s114, 1
    %s116 = scalar_select %p113, %s114, %s115
    %p119 = pneg %p113
    %p120 = scmp.eq.s32.totalorder %s12, 1
    %p121 = por %p119, %p120
    %p122 = scmp.ne.s32.totalorder %s114, %s117
    %p123 = scmp.eq.s32.totalorder %s12, 0
    %p124 = por %p122, %p123
    %p125 = scmp.ne.s32.totalorder %s114, %s117
    %p126 = scmp.eq.s32.totalorder %s17, 1
    %p127 = por %p125, %p126
    %p128 = scmp.ne.s32.totalorder %s117, %s118
    %p129 = scmp.eq.s32.totalorder %s17, 0
    %p130 = por %p128, %p129
    %p131 = scmp.ne.s32.totalorder %s117, %s118
    %p132 = scmp.eq.s32.totalorder %s18, 1
    %p133 = por %p131, %p132
    %p135 = scmp.ne.s32.totalorder %s118, %s134
    %p136 = scmp.eq.s32.totalorder %s18, 0
    %p137 = por %p135, %p136
    %s138 = ssub.s32 %s19, %s31
    %p139 = scmp.eq.s32.totalorder %s138, 0
    %s141 = sadd.s32 %s140, 1
    %s142 = scalar_select %p139, %s140, %s141
    %p145 = pneg %p139
    %p146 = scmp.eq.s32.totalorder %s12, 1
    %p147 = por %p145, %p146
    %p148 = scmp.ne.s32.totalorder %s140, %s143
    %p149 = scmp.eq.s32.totalorder %s12, 0
    %p150 = por %p148, %p149
    %p151 = scmp.ne.s32.totalorder %s140, %s143
    %p152 = scmp.eq.s32.totalorder %s17, 1
    %p153 = por %p151, %p152
    %p154 = scmp.ne.s32.totalorder %s143, %s144
    %p155 = scmp.eq.s32.totalorder %s17, 0
    %p156 = por %p154, %p155
    %p157 = scmp.ne.s32.totalorder %s143, %s144
    %p158 = scmp.eq.s32.totalorder %s18, 1
    %p159 = por %p157, %p158
    %p161 = scmp.ne.s32.totalorder %s144, %s160
    %p162 = scmp.eq.s32.totalorder %s18, 0
    %p163 = por %p161, %p162
    %s164 = ssub.s32 %s19, %s31
    %p165 = scmp.eq.s32.totalorder %s164, 0
    %s167 = sadd.s32 %s166, 1
    %s168 = scalar_select %p165, %s166, %s167
    %p171 = pneg %p165
    %p172 = scmp.eq.s32.totalorder %s12, 1
    %p173 = por %p171, %p172
    %p174 = scmp.ne.s32.totalorder %s166, %s169
    %p175 = scmp.eq.s32.totalorder %s12, 0
    %p176 = por %p174, %p175
    %p177 = scmp.ne.s32.totalorder %s166, %s169
    %p178 = scmp.eq.s32.totalorder %s17, 1
    %p179 = por %p177, %p178
    %p180 = scmp.ne.s32.totalorder %s169, %s170
    %p181 = scmp.eq.s32.totalorder %s17, 0
    %p182 = por %p180, %p181
    %p183 = scmp.ne.s32.totalorder %s169, %s170
    %p184 = scmp.eq.s32.totalorder %s18, 1
    %p185 = por %p183, %p184
    %p187 = scmp.ne.s32.totalorder %s170, %s186
    %p188 = scmp.eq.s32.totalorder %s18, 0
    %p189 = por %p187, %p188
    %s190 = ssub.s32 %s19, %s31
    %s191 = ssub.s32 %s20, %s27
    %s192 = sor.u32 %s190, %s191
    %p193 = scmp.eq.s32.totalorder %s192, 0
    %s195 = sadd.s32 %s194, 1
    %s196 = scalar_select %p193, %s194, %s195
    %p199 = pneg %p193
    %p200 = scmp.eq.s32.totalorder %s12, 1
    %p201 = por %p199, %p200
    %p202 = scmp.ne.s32.totalorder %s194, %s197
    %p203 = scmp.eq.s32.totalorder %s12, 0
    %p204 = por %p202, %p203
    %p205 = scmp.ne.s32.totalorder %s194, %s197
    %p206 = scmp.eq.s32.totalorder %s17, 1
    %p207 = por %p205, %p206
    %p208 = scmp.ne.s32.totalorder %s197, %s198
    %p209 = scmp.eq.s32.totalorder %s17, 0
    %p210 = por %p208, %p209
    %p211 = scmp.ne.s32.totalorder %s197, %s198
    %p212 = scmp.eq.s32.totalorder %s18, 1
    %p213 = por %p211, %p212
    %p215 = scmp.ne.s32.totalorder %s198, %s214
    %p216 = scmp.eq.s32.totalorder %s18, 0
    %p217 = por %p215, %p216
    %p218 = scmp.le.s32.totalorder 1, %s12
    %p219 = scmp.lt.s32.totalorder %s12, 3
    %p220 = pnand %p218, %p219
    %p221 = pneg %p220
    // Predicated region
    $region9: #{_encoder2_impl.1} parent=5 // pred_check
      _
    $region10: #{_encoder2_impl.1} parent=5 // pred_check_branch
      %223 = sbr.rel (%p220) target = $region12
    $region11: #{_encoder2_impl.1} parent=5 // pred_region
      %s224 = ssub.s32 %s12, 1
    $region12: #{_encoder2_impl.1} parent=5 // pred_fallthru
      _
    %p225 = scmp.lt.s32.totalorder %s12, 2
    // Predicated region
    $region13: #{_encoder2_impl.1} parent=5 // pred_check
      %p226 = pneg %p225
    $region14: #{_encoder2_impl.1} parent=5 // pred_check_branch
      %228 = sbr.rel (%p226) target = $region16
    $region15: #{_encoder2_impl.1} parent=5 // pred_region
      // Predicated region
      $region17: #{_encoder2_impl.1} parent=15 // pred_check
        %p229 = pneg %p46
      $region18: #{_encoder2_impl.1} parent=15 // pred_check_branch
        %231 = sbr.rel (%p229) target = $region20
      $region19: #{_encoder2_impl.1} parent=15 // pred_region
        %s232 = smul.u32 4, %s20
        %p233 = scmp.lt.s32.totalorder %s19, 1
        %s234 = scalar_select %p233, %s19, 1
        %p235 = scmp.lt.s32.totalorder %s232, 3
        %s236 = scalar_select %p235, %s232, 3
        %s237 = smul.addr %s234, 4
        %s238 = sadd.s32 %s236, %s237
        %s239 = smul.addr %s238, 4
        %s240 = scalar_lea.vmem %s0, %s239
        %s241 = smul.u32 4, %s20
      $region20: #{_encoder2_impl.1} parent=15 // pred_fallthru
        _
      // Predicated region
      $region21: #{_encoder2_impl.1} parent=15 // pred_check
        %p242 = pneg %p72
      $region22: #{_encoder2_impl.1} parent=15 // pred_check_branch
        %244 = sbr.rel (%p242) target = $region24
      $region23: #{_encoder2_impl.1} parent=15 // pred_region
        %p245 = scmp.lt.s32.totalorder %s19, 1
        %s246 = scalar_select %p245, %s19, 1
        %s247 = smul.addr %s246, 2
        %s248 = smul.addr %s247, 4
        %s249 = scalar_lea.vmem %s1, %s248
      $region24: #{_encoder2_impl.1} parent=15 // pred_fallthru
        _
      // Predicated region
      $region25: #{_encoder2_impl.1} parent=15 // pred_check
        %p250 = pneg %p98
      $region26: #{_encoder2_impl.1} parent=15 // pred_check_branch
        %252 = sbr.rel (%p250) target = $region28
      $region27: #{_encoder2_impl.1} parent=15 // pred_region
        %p253 = scmp.lt.s32.totalorder %s19, 1
        %s254 = scalar_select %p253, %s19, 1
        %s255 = scalar_lea.vmem %s2, %s254
      $region28: #{_encoder2_impl.1} parent=15 // pred_fallthru
        _
      // Predicated region
      $region29: #{_encoder2_impl.1} parent=15 // pred_check
        %p256 = pneg %p124
      $region30: #{_encoder2_impl.1} parent=15 // pred_check_branch
        %258 = sbr.rel (%p256) target = $region32
      $region31: #{_encoder2_impl.1} parent=15 // pred_region
        %p259 = scmp.lt.s32.totalorder %s19, 1
        %s260 = scalar_select %p259, %s19, 1
        %s261 = smul.addr %s260, 16
        %s262 = smul.addr %s261, 4
        %s263 = scalar_lea.vmem %s3, %s262
      $region32: #{_encoder2_impl.1} parent=15 // pred_fallthru
        _
      // Predicated region
      $region33: #{_encoder2_impl.1} parent=15 // pred_check
        %p264 = pneg %p150
      $region34: #{_encoder2_impl.1} parent=15 // pred_check_branch
        %266 = sbr.rel (%p264) target = $region36
      $region35: #{_encoder2_impl.1} parent=15 // pred_region
        %p267 = scmp.lt.s32.totalorder %s19, 1
        %s268 = scalar_select %p267, %s19, 1
        %s269 = scalar_lea.vmem %s4, %s268
      $region36: #{_encoder2_impl.1} parent=15 // pred_fallthru
        _
      // Predicated region
      $region37: #{_encoder2_impl.1} parent=15 // pred_check
        %p270 = pneg %p176
      $region38: #{_encoder2_impl.1} parent=15 // pred_check_branch
        %272 = sbr.rel (%p270) target = $region40
      $region39: #{_encoder2_impl.1} parent=15 // pred_region
        %p273 = scmp.lt.s32.totalorder %s19, 1
        %s274 = scalar_select %p273, %s19, 1
        %s275 = scalar_lea.vmem %s5, %s274
      $region40: #{_encoder2_impl.1} parent=15 // pred_fallthru
        _
    $region16: #{_encoder2_impl.1} parent=5 // pred_fallthru
      _
    %p276 = scmp.le.s32.totalorder 1, %s12
    %p277 = scmp.lt.s32.totalorder %s12, 3
    %p278 = pnand %p276, %p277
    %p279 = pneg %p278
    // Predicated region
    $region41: #{_encoder2_impl.1} parent=5 // pred_check
      _
    $region42: #{_encoder2_impl.1} parent=5 // pred_check_branch
      %281 = sbr.rel (%p278) target = $region44
    $region43: #{_encoder2_impl.1} parent=5 // pred_region
      %s282 = ssub.s32 %s12, 1
      %s283 = smul.u32 4, %s22
      %p284 = scmp.lt.s32.totalorder %s21, 1
      %s285 = scalar_select %p284, %s21, 1
      %p286 = scmp.lt.s32.totalorder %s283, 3
      %s287 = scalar_select %p286, %s283, 3
      %s288 = smul.addr %s285, 4
      %s289 = sadd.s32 %s287, %s288
      %s290 = smul.addr %s289, 4
      %s291 = scalar_lea.vmem %s0, %s290
      %p292 = pneg %p52
      %p293 = pneg %p49
      %p294 = scmp.lt.s32.totalorder %s21, 1
      %s295 = scalar_select %p294, %s21, 1
      %s296 = smul.addr %s295, 2
      %s297 = smul.addr %s296, 4
      %s298 = scalar_lea.vmem %s1, %s297
      %p299 = pneg %p78
      %p300 = pneg %p75
      %p301 = scmp.lt.s32.totalorder %s21, 1
      %s302 = scalar_select %p301, %s21, 1
      %s303 = scalar_lea.vmem %s2, %s302
      %p304 = pneg %p104
      %p305 = pneg %p101
      %p306 = scmp.lt.s32.totalorder %s21, 1
      %s307 = scalar_select %p306, %s21, 1
      %s308 = smul.addr %s307, 16
      %s309 = smul.addr %s308, 4
      %s310 = scalar_lea.vmem %s3, %s309
      %p311 = pneg %p130
      %p312 = pneg %p127
      %p313 = scmp.lt.s32.totalorder %s21, 1
      %s314 = scalar_select %p313, %s21, 1
      %s315 = scalar_lea.vmem %s4, %s314
      %p316 = pneg %p156
      %p317 = pneg %p153
      %p318 = scmp.lt.s32.totalorder %s21, 1
      %s319 = scalar_select %p318, %s21, 1
      %s320 = scalar_lea.vmem %s5, %s319
      %p321 = pneg %p182
      %p322 = pneg %p179
      %p323 = pneg %p210
      %p324 = pneg %p207
      %s325 = smul.u32 4, %s22
      %p326 = scmp.lt.s32.totalorder %s21, 1
      %s327 = scalar_select %p326, %s21, 1
      %p328 = scmp.lt.s32.totalorder %s325, 3
      %s329 = scalar_select %p328, %s325, 3
      %s330 = smul.addr %s327, 4
      %s331 = sadd.s32 %s329, %s330
      %s332 = smul.addr %s331, 8
      %s333 = scalar_lea.vmem %s6, %s332
      %s334 = smul.u32 4, %s22
      %p335 = scmp.lt.s32.totalorder %s21, 1
      %s336 = scalar_select %p335, %s21, 1
      %p337 = scmp.lt.s32.totalorder %s334, 3
      %s338 = scalar_select %p337, %s334, 3
      %s339 = smul.addr %s336, 4
      %s340 = sadd.s32 %s338, %s339
      %s341 = smul.addr %s340, 4
      %s342 = scalar_lea.vmem %s0, %s341
      %s343 = smul.u32 4, %s22
      %p344 = scmp.lt.s32.totalorder %s21, 1
      %s345 = scalar_select %p344, %s21, 1
      %s346 = smul.addr %s345, 2
      %s347 = smul.addr %s346, 4
      %s348 = scalar_lea.vmem %s1, %s347
      %p349 = scmp.lt.s32.totalorder %s21, 1
      %s350 = scalar_select %p349, %s21, 1
      %s351 = scalar_lea.vmem %s2, %s350
      %p352 = scmp.lt.s32.totalorder %s21, 1
      %s353 = scalar_select %p352, %s21, 1
      %s354 = smul.addr %s353, 16
      %s355 = smul.addr %s354, 4
      %s356 = scalar_lea.vmem %s3, %s355
      %p357 = scmp.lt.s32.totalorder %s21, 1
      %s358 = scalar_select %p357, %s21, 1
      %s359 = scalar_lea.vmem %s4, %s358
      %p360 = scmp.lt.s32.totalorder %s21, 1
      %s361 = scalar_select %p360, %s21, 1
      %s362 = scalar_lea.vmem %s5, %s361
      %s363 = smul.u32 4, %s22
      %p364 = scmp.lt.s32.totalorder %s21, 1
      %s365 = scalar_select %p364, %s21, 1
      %p366 = scmp.lt.s32.totalorder %s363, 3
      %s367 = scalar_select %p366, %s363, 3
      %s368 = smul.addr %s365, 4
      %s369 = sadd.s32 %s367, %s368
      %s370 = smul.addr %s369, 8
      %s371 = scalar_lea.vmem %s6, %s370
      %s372 = smul.u32 4, %s22
      %v374 = vld [vmem:[%s342] sm:$0xf]
      %v375 = vld [vmem:[%s342 + $0x4] sm:$0xf]
      %v376 = vld [vmem:[%s342 + $0x8] sm:$0xf]
      %v377 = vld [vmem:[%s342 + $0xc] sm:$0xf]
      %v378 = vld [vmem:[%s348] sm:$0xf]
      %v379 = vld [vmem:[%s348 + $0x4] sm:$0xf]
      %v380 = vld [vmem:[%s351] sm:$0x1]
      %v382 = vlaneseq
      %v383 = vshrl.u32 %v382, 7
      %v384 = vsub.s32 0, %v383
      %v385 = vrot.slane %v380, %v384
      %v391 = vunpack.c.l.b16 %v374
      %v392 = vunpack.c.l.b16 %v375
      %v393 = vunpack.c.l.b16 %v376
      %v394 = vunpack.c.l.b16 %v377
      %v395 = vpack.c.b16 %v392, %v391
      %v396 = vpack.c.b16 %v394, %v393
      %v399 = vunpack.c.l.b16 %v378
      %v400 = vunpack.c.l.b16 %v379
      %v401 = vpack.c.b16 %v400, %v399
      %vm403 = vcmask 130048
      %v405 = vsel %vm403, %v395, 0
      %v408 = vsel %vm403, %v396, 0
      %410 = vmatprep.subr.bf16.mxu0 0
      %411 = vmatpush1.bf16.msra.mxu0 %v401
      %412 = vmatprep.subr.bf16.mxu0 0
      %413 = vmatpush1.bf16.msra.mxu0 0
      %414 = vmatprep.subr.bf16.mxu0 0
      %415 = vmatpush1.bf16.msra.mxu0 0
      %416 = vmatprep.subr.bf16.mxu0 0
      %417 = vmatpush1.bf16.msra.mxu0 0
      %418 = vmatprep.subr.bf16.mxu0 0
      %419 = vmatpush1.bf16.msra.mxu0 0
      %420 = vmatprep.subr.bf16.mxu0 0
      %421 = vmatpush1.bf16.msra.mxu0 0
      %422 = vmatprep.subr.bf16.mxu0 0
      %423 = vmatpush1.bf16.msra.mxu0 0
      %424 = vmatprep.subr.bf16.mxu0 0
      %425 = vmatpush1.bf16.msra.mxu0 0
      %426 = vmatprep.subr.bf16.mxu0 0
      %427 = vmatpush1.bf16.msra.mxu0 0
      %428 = vmatprep.subr.bf16.mxu0 0
      %429 = vmatpush1.bf16.msra.mxu0 0
      %430 = vmatprep.subr.bf16.mxu0 0
      %431 = vmatpush1.bf16.msra.mxu0 0
      %432 = vmatprep.subr.bf16.mxu0 0
      %433 = vmatpush1.bf16.msra.mxu0 0
      %434 = vmatprep.subr.bf16.mxu0 0
      %435 = vmatpush1.bf16.msra.mxu0 0
      %436 = vmatprep.subr.bf16.mxu0 0
      %437 = vmatpush1.bf16.msra.mxu0 0
      %438 = vmatprep.subr.bf16.mxu0 0
      %439 = vmatpush1.bf16.msra.mxu0 0
      %440 = vmatprep.subr.bf16.mxu0 0
      %441 = vmatpush1.bf16.msra.mxu0 0
      %442 = vmatprep.mubr.bf16.mxu0 0
      %443 = vmatmul.mubr.bf16.gmra.mrb[0].mxu0 %v405
      %v444 = vpop.f32.mrb[0].mxu0
      %v445 = vadd.f32 %v385, %v444
      %v446 = vpop.f32.mrb[0].mxu0
      %v447 = vpop.f32.mrb[0].mxu0
      %v448 = vadd.f32 %v385, %v447
      %v449 = vpop.f32.mrb[0].mxu0
      %450 = vmatprep.mubr.bf16.mxu0 0
      %451 = vmatmul.mubr.bf16.gmra.mrb[0].mxu0 %v408
      %v452 = vpop.f32.mrb[0].mxu0
      %v453 = vadd.f32 %v385, %v452
      %v454 = vpop.f32.mrb[0].mxu0
      %v455 = vpop.f32.mrb[0].mxu0
      %v456 = vadd.f32 %v385, %v455
      %v457 = vpop.f32.mrb[0].mxu0
      %458 = vdwg.mxu0
      %vm459 = vcmp.ge.f32.partialorder %v445, 0.0
      %vm460 = vcmp.ge.f32.partialorder %v448, 0.0
      %vm461 = vcmp.ge.f32.partialorder %v453, 0.0
      %vm462 = vcmp.ge.f32.partialorder %v456, 0.0
      %v463 = vld [vmem:[%s362] sm:$0x1]
      %v465 = vlaneseq
      %v466 = vshrl.u32 %v465, 7
      %v467 = vsub.s32 0, %v466
      %v468 = vrot.slane %v463, %v467
      %v470 = vmul.f32 %v468, %v445
      %v471 = vmul.f32 %v468, %v448
      %v472 = vmul.f32 %v468, %v453
      %v473 = vmul.f32 %v468, %v456
      %v474 = vsel %vm459, %v445, %v470
      %v475 = vsel %vm460, %v448, %v471
      %v476 = vsel %vm461, %v453, %v472
      %v477 = vsel %vm462, %v456, %v473
      %v478 = vpack.c.bf16 %v475, %v474
      %v479 = vpack.c.bf16 %v477, %v476
      %v480 = vld [vmem:[%s356] sm:$0xf]
      %v481 = vld [vmem:[%s356 + $0x4] sm:$0xf]
      %v482 = vld [vmem:[%s356 + $0x8] sm:$0xf]
      %v483 = vld [vmem:[%s356 + $0xc] sm:$0xf]
      %v484 = vld [vmem:[%s356 + $0x10] sm:$0xf]
      %v485 = vld [vmem:[%s356 + $0x14] sm:$0xf]
      %v486 = vld [vmem:[%s356 + $0x18] sm:$0xf]
      %v487 = vld [vmem:[%s356 + $0x1c] sm:$0xf]
      %v488 = vld [vmem:[%s356 + $0x20] sm:$0xf]
      %v489 = vld [vmem:[%s356 + $0x24] sm:$0xf]
      %v490 = vld [vmem:[%s356 + $0x28] sm:$0xf]
      %v491 = vld [vmem:[%s356 + $0x2c] sm:$0xf]
      %v492 = vld [vmem:[%s356 + $0x30] sm:$0xf]
      %v493 = vld [vmem:[%s356 + $0x34] sm:$0xf]
      %v494 = vld [vmem:[%s356 + $0x38] sm:$0xf]
      %v495 = vld [vmem:[%s356 + $0x3c] sm:$0xf]
      %v496 = vld [vmem:[%s359] sm:$0x1]
      %v498 = vlaneseq
      %v499 = vshrl.u32 %v498, 7
      %v500 = vsub.s32 0, %v499
      %v501 = vrot.slane %v496, %v500
      %v519 = vunpack.c.l.b16 %v480
      %v520 = vunpack.c.l.b16 %v481
      %v521 = vunpack.c.l.b16 %v482
      %v522 = vunpack.c.l.b16 %v483
      %v523 = vunpack.c.l.b16 %v484
      %v524 = vunpack.c.l.b16 %v485
      %v525 = vunpack.c.l.b16 %v486
      %v526 = vunpack.c.l.b16 %v487
      %v527 = vunpack.c.l.b16 %v488
      %v528 = vunpack.c.l.b16 %v489
      %v529 = vunpack.c.l.b16 %v490
      %v530 = vunpack.c.l.b16 %v491
      %v531 = vunpack.c.l.b16 %v492
      %v532 = vunpack.c.l.b16 %v493
      %v533 = vunpack.c.l.b16 %v494
      %v534 = vunpack.c.l.b16 %v495
      %v535 = vpack.c.b16 %v520, %v519
      %v536 = vpack.c.b16 %v522, %v521
      %v537 = vpack.c.b16 %v524, %v523
      %v538 = vpack.c.b16 %v526, %v525
      %v539 = vpack.c.b16 %v528, %v527
      %v540 = vpack.c.b16 %v530, %v529
      %v541 = vpack.c.b16 %v532, %v531
      %v542 = vpack.c.b16 %v534, %v533
      %551 = vmatprep.subr.bf16.mxu0 0
      %552 = vmatpush1.bf16.msra.mxu0 %v535
      %553 = vmatprep.subr.bf16.mxu0 0
      %554 = vmatpush1.bf16.msra.mxu0 %v536
      %555 = vmatprep.subr.bf16.mxu0 0
      %556 = vmatpush1.bf16.msra.mxu0 %v537
      %557 = vmatprep.subr.bf16.mxu0 0
      %558 = vmatpush1.bf16.msra.mxu0 %v538
      %559 = vmatprep.subr.bf16.mxu0 0
      %560 = vmatpush1.bf16.msra.mxu0 %v539
      %561 = vmatprep.subr.bf16.mxu0 0
      %562 = vmatpush1.bf16.msra.mxu0 %v540
      %563 = vmatprep.subr.bf16.mxu0 0
      %564 = vmatpush1.bf16.msra.mxu0 %v541
      %565 = vmatprep.subr.bf16.mxu0 0
      %566 = vmatpush1.bf16.msra.mxu0 %v542
      %567 = vmatprep.subr.bf16.mxu0 0
      %568 = vmatpush1.bf16.msra.mxu0 0
      %569 = vmatprep.subr.bf16.mxu0 0
      %570 = vmatpush1.bf16.msra.mxu0 0
      %571 = vmatprep.subr.bf16.mxu0 0
      %572 = vmatpush1.bf16.msra.mxu0 0
      %573 = vmatprep.subr.bf16.mxu0 0
      %574 = vmatpush1.bf16.msra.mxu0 0
      %575 = vmatprep.subr.bf16.mxu0 0
      %576 = vmatpush1.bf16.msra.mxu0 0
      %577 = vmatprep.subr.bf16.mxu0 0
      %578 = vmatpush1.bf16.msra.mxu0 0
      %579 = vmatprep.subr.bf16.mxu0 0
      %580 = vmatpush1.bf16.msra.mxu0 0
      %581 = vmatprep.subr.bf16.mxu0 0
      %582 = vmatpush1.bf16.msra.mxu0 0
      %583 = vmatprep.mubr.bf16.mxu0 0
      %584 = vmatmul.mubr.bf16.gmra.mrb[0].mxu0 %v478
      %v585 = vpop.f32.mrb[0].mxu0
      %v586 = vadd.f32 %v501, %v585
      %v587 = vpop.f32.mrb[0].mxu0
      %v588 = vpop.f32.mrb[0].mxu0
      %v589 = vadd.f32 %v501, %v588
      %v590 = vpop.f32.mrb[0].mxu0
      %591 = vmatprep.mubr.bf16.mxu0 0
      %592 = vmatmul.mubr.bf16.gmra.mrb[0].mxu0 %v479
      %v593 = vpop.f32.mrb[0].mxu0
      %v594 = vadd.f32 %v501, %v593
      %v595 = vpop.f32.mrb[0].mxu0
      %v596 = vpop.f32.mrb[0].mxu0
      %v597 = vadd.f32 %v501, %v596
      %v598 = vpop.f32.mrb[0].mxu0
      %599 = vdwg.mxu0
      %600 = vst [vmem:[%s371] sm:$0xff] %v586
      %601 = vst [vmem:[%s371 + $0x8] sm:$0xff] %v589
      %602 = vst [vmem:[%s371 + $0x10] sm:$0xff] %v594
      %603 = vst [vmem:[%s371 + $0x18] sm:$0xff] %v597
      %s604 = smul.u32 4, %s22
      %p605 = scmp.lt.s32.totalorder %s21, 1
      %s606 = scalar_select %p605, %s21, 1
      %p607 = scmp.lt.s32.totalorder %s604, 3
      %s608 = scalar_select %p607, %s604, 3
      %s609 = smul.addr %s606, 4
      %s610 = sadd.s32 %s608, %s609
      %s611 = smul.addr %s610, 8
      %s612 = scalar_lea.vmem %s6, %s611
      // Predicated region
      $region45: #{_encoder2_impl.1} parent=43 // pred_check
        %p613 = pneg %p207
      $region46: #{_encoder2_impl.1} parent=43 // pred_check_branch
        %615 = sbr.rel (%p613) target = $region48
      $region47: #{_encoder2_impl.1} parent=43 // pred_region
        %s616 = smul.u32 4, %s22
      $region48: #{_encoder2_impl.1} parent=43 // pred_fallthru
        _
    $region44: #{_encoder2_impl.1} parent=5 // pred_fallthru
      _
    %p617 = scmp.le.s32.totalorder 2, %s12
    // Predicated region
    $region49: #{_encoder2_impl.1} parent=5 // pred_check
      %p618 = pneg %p617
    $region50: #{_encoder2_impl.1} parent=5 // pred_check_branch
      %620 = sbr.rel (%p618) target = $region52
    $region51: #{_encoder2_impl.1} parent=5 // pred_region
      %s621 = ssub.s32 %s12, 2
      // Predicated region
      $region53: #{_encoder2_impl.1} parent=51 // pred_check
        %p622 = pneg %p213
      $region54: #{_encoder2_impl.1} parent=51 // pred_check_branch
        %624 = sbr.rel (%p622) target = $region56
      $region55: #{_encoder2_impl.1} parent=51 // pred_region
        %s625 = smul.u32 4, %s24
        %p626 = scmp.lt.s32.totalorder %s23, 1
        %s627 = scalar_select %p626, %s23, 1
        %p628 = scmp.lt.s32.totalorder %s625, 3
        %s629 = scalar_select %p628, %s625, 3
        %s630 = smul.addr %s627, 4
        %s631 = sadd.s32 %s629, %s630
        %s632 = smul.addr %s631, 8
        %s633 = scalar_lea.vmem %s6, %s632
      $region56: #{_encoder2_impl.1} parent=51 // pred_fallthru
        _
    $region52: #{_encoder2_impl.1} parent=5 // pred_fallthru
      _
  $region6: #{_encoder2_impl.1} parent=0 // loop_footer
    %s16 = sadd.s32 1, %s12
  $region7: #{_encoder2_impl.1} parent=0 // loop_footer_branch
    %11 = sbr.rel target = $region3
  $region8: #{_encoder2_impl.1} parent=0 // loop_exit
    _

</llo_original>
